<compile_context>
chip_gen: v6e
topology: v6e:2x2x1
jax: 0.10.0
libtpu: 0.0.40
codegen_flags: <defaults>
</compile_context>

<pallas_src>
import numpy as np
import jax
import jax.numpy as jnp
from jax import lax
from jax.experimental import pallas as pl
from jax.experimental.pallas import tpu as pltpu


def _round_up(x, m):
    return ((x + m - 1) // m) * m


def custom_clip_kernel(scale_ref, x_ref, w_ref, text_ref, out_ref, acc_ref):
    # scale_ref: (1,)        f32 SMEM   logit_scale (pre-exp), scalar-prefetched
    # x_ref:     (TB, TP)    bf16       flattened-image tile (already model dtype)
    # w_ref:     (TP, D)     bf16       stand-in image-encoder weight tile
    # text_ref:  (K_pad, D)  bf16       pre-L2-normalized text features (zero-padded rows)
    # out_ref:   (TB, K_pad) f32        logits tile (lane-dense, K padded to 128)
    # acc_ref:   (TB, D)     f32 VMEM   encoder-output accumulator
    pid_p = pl.program_id(1)

    @pl.when(pid_p == 0)
    def _():
        acc_ref[...] = jnp.zeros_like(acc_ref)

    # "image_encoder": streamed matmul, accumulated in f32 across the P axis.
    acc_ref[...] += jnp.dot(x_ref[...], w_ref[...],
                            preferred_element_type=jnp.float32)

    @pl.when(pid_p == pl.num_programs(1) - 1)
    def _():
        feats = acc_ref[...]                                        # (TB, D) f32
        sq = jnp.sum(feats * feats, axis=-1, keepdims=True)         # ||f||^2
        # Fold logit_scale.exp() into the per-row 1/||f|| so the (TB, K_pad)
        # tensor needs no extra elementwise multiply.  The tiny clamp only
        # protects all-zero padding rows; real rows are unaffected.
        inv = jnp.exp(scale_ref[0]) * lax.rsqrt(jnp.maximum(sq, 1e-30))
        feats_n = (feats * inv).astype(jnp.bfloat16)                # bf16 for the MXU
        # (TB, D) . (K_pad, D)^T contracted on the shared D axis -> (TB, K_pad);
        # avoids materializing text_features.T and keeps D on the lane axis.
        logits = lax.dot_general(
            feats_n, text_ref[...],
            dimension_numbers=(((1,), (1,)), ((), ())),
            preferred_element_type=jnp.float32)
        out_ref[...] = logits.astype(out_ref.dtype)


def custom_clip_forward(image, w_enc, text_features, logit_scale,
                        *, model_dtype=jnp.bfloat16, tb=128, tp=2048):
    """image: (B, C, H, W) f32; w_enc: (C*H*W, D) stand-in encoder weights;
    text_features: (K, D) f32 (already L2-normalized); logit_scale: scalar f32 (pre-exp)."""
    B = image.shape[0]
    P = int(np.prod(image.shape[1:]))
    K, D = text_features.shape

    # Tile sizes: stream w_enc/x over P in (TP, D)/(TB, TP) tiles (double-buffered
    # by BlockSpec).  TP=2048 keeps double-buffered tiles well under the 32 MiB
    # default scoped VMEM on every generation (incl. v7x's 64 MiB physical).
    TB = min(tb, _round_up(B, 8))
    TP = min(tp, _round_up(P, 128))
    B_pad = _round_up(B, TB)
    P_pad = _round_up(P, TP)
    K_pad = _round_up(K, 128)          # lane-dense output / text rows

    x = image.reshape(B, P).astype(model_dtype)                    # image.type(self.dtype)
    x = jnp.pad(x, ((0, B_pad - B), (0, P_pad - P)))
    w = jnp.pad(w_enc.astype(model_dtype), ((0, P_pad - P), (0, 0)))
    text = jnp.pad(text_features.astype(model_dtype), ((0, K_pad - K), (0, 0)))
    scale = jnp.asarray(logit_scale, jnp.float32).reshape(1)

    grid = (B_pad // TB, P_pad // TP)

    flops = 2 * B_pad * P_pad * D + 2 * B_pad * D * K_pad
    bytes_accessed = (B_pad * P_pad + P_pad * D + K_pad * D) * 2 + B_pad * K_pad * 4

    out = pl.pallas_call(
        custom_clip_kernel,
        out_shape=jax.ShapeDtypeStruct((B_pad, K_pad), jnp.float32),
        grid_spec=pltpu.PrefetchScalarGridSpec(
            num_scalar_prefetch=1,                                  # logit_scale -> SMEM
            grid=grid,
            in_specs=[
                pl.BlockSpec((TB, TP), lambda b, p, s: (b, p)),     # x tile
                pl.BlockSpec((TP, D), lambda b, p, s: (p, 0)),      # w_enc tile (streamed)
                pl.BlockSpec((K_pad, D), lambda b, p, s: (0, 0)),   # text features (resident)
            ],
            out_specs=pl.BlockSpec((TB, K_pad), lambda b, p, s: (b, 0)),
            scratch_shapes=[pltpu.VMEM((TB, D), jnp.float32)],      # f32 accumulator
        ),
        compiler_params=pltpu.CompilerParams(
            dimension_semantics=("parallel", "arbitrary")),
        cost_estimate=pl.CostEstimate(
            flops=flops, transcendentals=2 * B_pad, bytes_accessed=bytes_accessed),
    )(scale, x, w, text)

    return out[:B, :K]


def reference_forward(image, w_enc, text_features, logit_scale,
                      *, model_dtype=jnp.bfloat16):
    x = image.reshape(image.shape[0], -1).astype(model_dtype)
    feats = jnp.dot(x, w_enc.astype(model_dtype), preferred_element_type=jnp.float32)
    feats = feats / jnp.linalg.norm(feats, axis=-1, keepdims=True)
    logits = lax.dot_general(
        feats.astype(model_dtype), text_features.astype(model_dtype),
        dimension_numbers=(((1,), (1,)), ((), ())),
        preferred_element_type=jnp.float32)
    return jnp.exp(jnp.float32(logit_scale)) * logits


if __name__ == "__main__":
    # Small synthetic shapes consistent with the forward:
    #   batch=2, channels=3, spatial=16x16, embed_dim=32, num_classes=8
    B, C, H, W = 2, 3, 16, 16
    D, K = 32, 8

    key = jax.random.PRNGKey(0)
    k_img, k_w, k_txt = jax.random.split(key, 3)

    image = jax.random.normal(k_img, (B, C, H, W), jnp.float32)

    # Deterministic stand-in image encoder weights (flattened pixels -> D).
    w_enc = (0.02 * jax.random.normal(k_w, (C * H * W, D), jnp.float32)).astype(jnp.bfloat16)

    # Frozen, pre-normalized text features (as computed in __init__ under no_grad).
    text_raw = jax.random.normal(k_txt, (K, D), jnp.float32)
    text_features = text_raw / jnp.linalg.norm(text_raw, axis=-1, keepdims=True)

    # CLIP's default logit_scale init: log(1/0.07); forward uses exp() of it.
    logit_scale = jnp.float32(np.log(1.0 / 0.07))

    logits = custom_clip_forward(image, w_enc, text_features, logit_scale)
    logits = jax.block_until_ready(logits)
    assert logits.shape == (B, K)

    ref = reference_forward(image, w_enc, text_features, logit_scale)
    np.testing.assert_allclose(np.asarray(logits), np.asarray(ref), rtol=2e-2, atol=2e-2)

    print("KERNEL_OK")
</pallas_src>

<mosaic_0001>
module attributes {stable_mosaic.version = 11 : i64} {
  func.func @custom_clip_kernel(%arg0: i32, %arg1: i32, %arg2: memref<1xf32, #tpu.memory_space<smem>>, %arg3: memref<8x768xbf16, #tpu.memory_space<vmem>>, %arg4: memref<768x32xbf16, #tpu.memory_space<vmem>>, %arg5: memref<128x32xbf16, #tpu.memory_space<vmem>>, %arg6: memref<8x128xf32, #tpu.memory_space<vmem>>, %arg7: memref<8x32xf32, #tpu.memory_space<vmem>>) attributes {dimension_semantics = [#tpu.dimension_semantics<parallel>, #tpu.dimension_semantics<arbitrary>], iteration_bounds = array<i64: 1, 1>, scalar_prefetch = 1 : i64, scratch_operands = 1 : i64, tpu.core_type = #tpu.core_type<tc>, window_params = [{transform_indices = @transform_0, window_bounds = array<i64: 8, 768>}, {transform_indices = @transform_1, window_bounds = array<i64: 768, 32>}, {pipeline_mode = #tpu.pipeline_mode<synchronous>, transform_indices = @transform_2, window_bounds = array<i64: 128, 32>}, {transform_indices = @transform_3, window_bounds = array<i64: 8, 128>}]} {
    %c0_i32 = arith.constant 0 : i32
    %0 = arith.cmpi eq, %arg1, %c0_i32 : i32
    %1 = arith.extui %0 : i1 to i32
    %c0_i32_0 = arith.constant 0 : i32
    %2 = arith.cmpi ne, %1, %c0_i32_0 : i32
    scf.if %2 {
      %cst_10 = arith.constant 0.000000e+00 : f32
      %12 = vector.broadcast %cst_10 : f32 to vector<8x32xf32>
      %c0_11 = arith.constant 0 : index
      %c0_12 = arith.constant 0 : index
      %13 = vector.load %arg7[%c0_11, %c0_12] : memref<8x32xf32, #tpu.memory_space<vmem>>, vector<8x32xf32>
      tpu.vector_store %arg7[%c0_11, %c0_12], %12 {strides = array<i32>} : memref<8x32xf32, #tpu.memory_space<vmem>>, vector<8x32xf32>,
    } else {
    }
    %c0 = arith.constant 0 : index
    %c0_1 = arith.constant 0 : index
    %3 = vector.load %arg7[%c0, %c0_1] : memref<8x32xf32, #tpu.memory_space<vmem>>, vector<8x32xf32>
    %c0_2 = arith.constant 0 : index
    %c0_3 = arith.constant 0 : index
    %4 = vector.load %arg3[%c0_2, %c0_3] : memref<8x768xbf16, #tpu.memory_space<vmem>>, vector<8x768xbf16>
    %c0_4 = arith.constant 0 : index
    %c0_5 = arith.constant 0 : index
    %5 = vector.load %arg4[%c0_4, %c0_5] : memref<768x32xbf16, #tpu.memory_space<vmem>>, vector<768x32xbf16>
    %cst = arith.constant dense<0.000000e+00> : vector<8x32xf32>
    %6 = tpu.matmul %4, %5, %cst {dimension_numbers = #tpu.dot_dimension_numbers<[1], [0], [0], [1], [0, 0, 1, 1], [], []>} : vector<8x768xbf16>, vector<768x32xbf16>, vector<8x32xf32> -> vector<8x32xf32>
    %7 = arith.addf %3, %6 : vector<8x32xf32>
    %c0_6 = arith.constant 0 : index
    %c0_7 = arith.constant 0 : index
    %8 = vector.load %arg7[%c0_6, %c0_7] : memref<8x32xf32, #tpu.memory_space<vmem>>, vector<8x32xf32>
    tpu.vector_store %arg7[%c0_6, %c0_7], %7 {strides = array<i32>} : memref<8x32xf32, #tpu.memory_space<vmem>>, vector<8x32xf32>,
    %c0_i32_8 = arith.constant 0 : i32
    %9 = arith.cmpi eq, %arg1, %c0_i32_8 : i32
    %10 = arith.extui %9 : i1 to i32
    %c0_i32_9 = arith.constant 0 : i32
    %11 = arith.cmpi ne, %10, %c0_i32_9 : i32
    scf.if %11 {
      %c0_10 = arith.constant 0 : index
      %c0_11 = arith.constant 0 : index
      %12 = vector.load %arg7[%c0_10, %c0_11] : memref<8x32xf32, #tpu.memory_space<vmem>>, vector<8x32xf32>
      %13 = arith.mulf %12, %12 : vector<8x32xf32>
      %cst_12 = arith.constant dense<0.000000e+00> : vector<8xf32>
      %14 = vector.multi_reduction <add>, %13, %cst_12 [1] : vector<8x32xf32> to vector<8xf32>
      %15 = vector.shape_cast %14 : vector<8xf32> to vector<8x1xf32>
      %c0_13 = arith.constant 0 : index
      %16 = memref.load %arg2[%c0_13] : memref<1xf32, #tpu.memory_space<smem>>
      %17 = math.exp %16 : f32
      %cst_14 = arith.constant 1.000000e-30 : f32
      %18 = vector.broadcast %cst_14 : f32 to vector<8x1xf32>
      %19 = arith.maximumf %15, %18 : vector<8x1xf32>
      %20 = math.rsqrt %19 : vector<8x1xf32>
      %21 = vector.broadcast %17 : f32 to vector<8x1xf32>
      %22 = arith.mulf %21, %20 : vector<8x1xf32>
      %23 = vector.broadcast %22 : vector<8x1xf32> to vector<8x32xf32>
      %24 = arith.mulf %12, %23 : vector<8x32xf32>
      %25 = arith.truncf %24 : vector<8x32xf32> to vector<8x32xbf16>
      %c0_15 = arith.constant 0 : index
      %c0_16 = arith.constant 0 : index
      %26 = vector.load %arg5[%c0_15, %c0_16] : memref<128x32xbf16, #tpu.memory_space<vmem>>, vector<128x32xbf16>
      %cst_17 = arith.constant dense<0.000000e+00> : vector<8x128xf32>
      %27 = tpu.matmul %25, %26, %cst_17 {dimension_numbers = #tpu.dot_dimension_numbers<[1], [1], [0], [0], [0, 0, 1, 0], [], []>} : vector<8x32xbf16>, vector<128x32xbf16>, vector<8x128xf32> -> vector<8x128xf32>
      %c0_18 = arith.constant 0 : index
      %c0_19 = arith.constant 0 : index
      %28 = vector.load %arg6[%c0_18, %c0_19] : memref<8x128xf32, #tpu.memory_space<vmem>>, vector<8x128xf32>
      tpu.vector_store %arg6[%c0_18, %c0_19], %27 {strides = array<i32>} : memref<8x128xf32, #tpu.memory_space<vmem>>, vector<8x128xf32>,
    } else {
    }
    return
  }
  func.func @transform_0(%arg0: i32, %arg1: i32, %arg2: memref<1xf32, #tpu.memory_space<smem>>) -> (i32, i32) {
    %c0_i32 = arith.constant 0 : i32
    return %arg0, %arg1 : i32, i32
  }
  func.func @transform_1(%arg0: i32, %arg1: i32, %arg2: memref<1xf32, #tpu.memory_space<smem>>) -> (i32, i32) {
    %c0_i32 = arith.constant 0 : i32
    %c0_i32_0 = arith.constant 0 : i32
    return %arg1, %c0_i32 : i32, i32
  }
  func.func @transform_2(%arg0: i32, %arg1: i32, %arg2: memref<1xf32, #tpu.memory_space<smem>>) -> (i32, i32) {
    %c0_i32 = arith.constant 0 : i32
    %c0_i32_0 = arith.constant 0 : i32
    %c0_i32_1 = arith.constant 0 : i32
    return %c0_i32, %c0_i32_0 : i32, i32
  }
  func.func @transform_3(%arg0: i32, %arg1: i32, %arg2: memref<1xf32, #tpu.memory_space<smem>>) -> (i32, i32) {
    %c0_i32 = arith.constant 0 : i32
    %c0_i32_0 = arith.constant 0 : i32
    return %arg0, %c0_i32 : i32, i32
  }
}

</mosaic_0001>

<llo_original>
// kernel: tpu_custom_call.1
$region0: #{tpu_custom_call.1}
  #allocation0 [shape = 'u32[]', space=smem, size = 0x4, offset = 0x4, fixed_abs, tag = 'smem constant byte address 0x4 - core index']
  #allocation1 [shape = 'u32[144,128]{1,0:T(1,128)}', space=vmem, size = 0x12000, scoped, tag = 'internal scratch']
  #allocation2 [shape = 'f32[8,32]{1,0:T(8,128)}', space=vmem, size = 0x1000, scoped, tag = 'scratch operand']
  #allocation3 [shape = 's32[1]{0}', space=sflag, size = 0x4, scoped, tag = 'scoped memory for tpu_custom_call.1']
  #allocation4 [shape = 'f32[1]{0:T(128)S(6)}', space=smem, size = 0x200, scoped, tag = 'prefetched SMEM operand 0']
  %s0 = inlined_call_operand.<no memory space> [shape: f32[1], index: 0, kind: input, shape index: {}]
  %s1 = inlined_call_operand.vmem [shape: bf16[8,768], index: 1, kind: input, shape index: {}]
  %s2 = inlined_call_operand.vmem [shape: bf16[768,32], index: 2, kind: input, shape index: {}]
  %s3 = inlined_call_operand.vmem [shape: bf16[128,32], index: 3, kind: input, shape index: {}]
  %s4 = inlined_call_operand.hbm [shape: f32[8,128], index: 4, kind: output, shape index: {}]
  %s5 = sld [smem:[#allocation0]]
  $region30: #{tpu_custom_call.1} parent=0
    _
  %s7 = ssub.s32 1, %s5
  %s8 = scalar_select 0, %s7, %s5
  %9 = sst [smem:[#allocation4]] %s0
  $region1: #{tpu_custom_call.1} parent=0
    #allocation5 [shape = 'u8[4096]{0}', space=vmem, size = 0x1000, scoped, tag = 'output window, operand 0, single buffered']
    #allocation6 [shape = 's32[1]{0}', space=sflag, size = 0x4, scoped, tag = 'scoped memory for tpu_custom_call.1']
    %10 = vsyncpa [#allocation6], 0
    // Predicated region
    $region2: #{tpu_custom_call.1} parent=1 // pred_check
      _
    $region3: #{tpu_custom_call.1} parent=1 // pred_check_branch
      %12 = sbr.rel (0) target = $region5
    $region4: #{tpu_custom_call.1} parent=1 // pred_region
      _
    $region5: #{tpu_custom_call.1} parent=1 // pred_fallthru
      _
    // Predicated region
    $region6: #{tpu_custom_call.1} parent=1 // pred_check
      _
    $region7: #{tpu_custom_call.1} parent=1 // pred_check_branch
      %14 = sbr.rel (0) target = $region9
    $region8: #{tpu_custom_call.1} parent=1 // pred_region
      _
    $region9: #{tpu_custom_call.1} parent=1 // pred_fallthru
      _
    // Predicated region
    $region10: #{tpu_custom_call.1} parent=1 // pred_check
      _
    $region11: #{tpu_custom_call.1} parent=1 // pred_check_branch
      %16 = sbr.rel (0) target = $region13
    $region12: #{tpu_custom_call.1} parent=1 // pred_region
      _
    $region13: #{tpu_custom_call.1} parent=1 // pred_fallthru
      _
    %p18 = scmp.eq.s32.totalorder 0, 0
    // Predicated region
    $region14: #{tpu_custom_call.1} parent=1 // pred_check
      %p19 = pneg %p18
    $region15: #{tpu_custom_call.1} parent=1 // pred_check_branch
      %21 = sbr.rel (%p19) target = $region17
    $region16: #{tpu_custom_call.1} parent=1 // pred_region
      %vm22 = vcmask 261120
      %23 = vst.msk [vmem:[#allocation2] sm:$0xff] %vm22, 0.0
    $region17: #{tpu_custom_call.1} parent=1 // pred_fallthru
      _
    %v24 = vld [vmem:[#allocation2] sm:$0xff]
    %v25 = vld [vmem:[%s1] sm:$0xff]
    %v26 = vld [vmem:[%s1 + $0x8] sm:$0xff]
    %v27 = vld [vmem:[%s1 + $0x10] sm:$0xff]
    %v28 = vld [vmem:[%s2] sm:$0xf]
    %v29 = vld [vmem:[%s2 + $0x4] sm:$0xf]
    %v30 = vld [vmem:[%s2 + $0x8] sm:$0xf]
    %v31 = vld [vmem:[%s2 + $0xc] sm:$0xf]
    %v32 = vld [vmem:[%s2 + $0x10] sm:$0xf]
    %v33 = vld [vmem:[%s2 + $0x14] sm:$0xf]
    %v34 = vld [vmem:[%s2 + $0x18] sm:$0xf]
    %v35 = vld [vmem:[%s2 + $0x1c] sm:$0xf]
    %v36 = vld [vmem:[%s2 + $0x20] sm:$0xf]
    %v37 = vld [vmem:[%s2 + $0x24] sm:$0xf]
    %v38 = vld [vmem:[%s2 + $0x28] sm:$0xf]
    %v39 = vld [vmem:[%s2 + $0x2c] sm:$0xf]
    %v40 = vld [vmem:[%s2 + $0x30] sm:$0xf]
    %v41 = vld [vmem:[%s2 + $0x34] sm:$0xf]
    %v42 = vld [vmem:[%s2 + $0x38] sm:$0xf]
    %v43 = vld [vmem:[%s2 + $0x3c] sm:$0xf]
    %v44 = vld [vmem:[%s2 + $0x40] sm:$0xf]
    %v45 = vld [vmem:[%s2 + $0x44] sm:$0xf]
    %v46 = vld [vmem:[%s2 + $0x48] sm:$0xf]
    %v47 = vld [vmem:[%s2 + $0x4c] sm:$0xf]
    %v48 = vld [vmem:[%s2 + $0x50] sm:$0xf]
    %v49 = vld [vmem:[%s2 + $0x54] sm:$0xf]
    %v50 = vld [vmem:[%s2 + $0x58] sm:$0xf]
    %v51 = vld [vmem:[%s2 + $0x5c] sm:$0xf]
    %v52 = vld [vmem:[%s2 + $0x60] sm:$0xf]
    %v53 = vld [vmem:[%s2 + $0x64] sm:$0xf]
    %v54 = vld [vmem:[%s2 + $0x68] sm:$0xf]
    %v55 = vld [vmem:[%s2 + $0x6c] sm:$0xf]
    %v56 = vld [vmem:[%s2 + $0x70] sm:$0xf]
    %v57 = vld [vmem:[%s2 + $0x74] sm:$0xf]
    %v58 = vld [vmem:[%s2 + $0x78] sm:$0xf]
    %v59 = vld [vmem:[%s2 + $0x7c] sm:$0xf]
    %v60 = vld [vmem:[%s2 + $0x80] sm:$0xf]
    %v61 = vld [vmem:[%s2 + $0x84] sm:$0xf]
    %v62 = vld [vmem:[%s2 + $0x88] sm:$0xf]
    %v63 = vld [vmem:[%s2 + $0x8c] sm:$0xf]
    %v64 = vld [vmem:[%s2 + $0x90] sm:$0xf]
    %v65 = vld [vmem:[%s2 + $0x94] sm:$0xf]
    %v66 = vld [vmem:[%s2 + $0x98] sm:$0xf]
    %v67 = vld [vmem:[%s2 + $0x9c] sm:$0xf]
    %v68 = vld [vmem:[%s2 + $0xa0] sm:$0xf]
    %v69 = vld [vmem:[%s2 + $0xa4] sm:$0xf]
    %v70 = vld [vmem:[%s2 + $0xa8] sm:$0xf]
    %v71 = vld [vmem:[%s2 + $0xac] sm:$0xf]
    %v72 = vld [vmem:[%s2 + $0xb0] sm:$0xf]
    %v73 = vld [vmem:[%s2 + $0xb4] sm:$0xf]
    %v74 = vld [vmem:[%s2 + $0xb8] sm:$0xf]
    %v75 = vld [vmem:[%s2 + $0xbc] sm:$0xf]
    %v76 = vld [vmem:[%s2 + $0xc0] sm:$0xf]
    %v77 = vld [vmem:[%s2 + $0xc4] sm:$0xf]
    %v78 = vld [vmem:[%s2 + $0xc8] sm:$0xf]
    %v79 = vld [vmem:[%s2 + $0xcc] sm:$0xf]
    %v80 = vld [vmem:[%s2 + $0xd0] sm:$0xf]
    %v81 = vld [vmem:[%s2 + $0xd4] sm:$0xf]
    %v82 = vld [vmem:[%s2 + $0xd8] sm:$0xf]
    %v83 = vld [vmem:[%s2 + $0xdc] sm:$0xf]
    %v84 = vld [vmem:[%s2 + $0xe0] sm:$0xf]
    %v85 = vld [vmem:[%s2 + $0xe4] sm:$0xf]
    %v86 = vld [vmem:[%s2 + $0xe8] sm:$0xf]
    %v87 = vld [vmem:[%s2 + $0xec] sm:$0xf]
    %v88 = vld [vmem:[%s2 + $0xf0] sm:$0xf]
    %v89 = vld [vmem:[%s2 + $0xf4] sm:$0xf]
    %v90 = vld [vmem:[%s2 + $0xf8] sm:$0xf]
    %v91 = vld [vmem:[%s2 + $0xfc] sm:$0xf]
    %v92 = vld [vmem:[%s2 + $0x100] sm:$0xf]
    %v93 = vld [vmem:[%s2 + $0x104] sm:$0xf]
    %v94 = vld [vmem:[%s2 + $0x108] sm:$0xf]
    %v95 = vld [vmem:[%s2 + $0x10c] sm:$0xf]
    %v96 = vld [vmem:[%s2 + $0x110] sm:$0xf]
    %v97 = vld [vmem:[%s2 + $0x114] sm:$0xf]
    %v98 = vld [vmem:[%s2 + $0x118] sm:$0xf]
    %v99 = vld [vmem:[%s2 + $0x11c] sm:$0xf]
    %v100 = vld [vmem:[%s2 + $0x120] sm:$0xf]
    %v101 = vld [vmem:[%s2 + $0x124] sm:$0xf]
    %v102 = vld [vmem:[%s2 + $0x128] sm:$0xf]
    %v103 = vld [vmem:[%s2 + $0x12c] sm:$0xf]
    %v104 = vld [vmem:[%s2 + $0x130] sm:$0xf]
    %v105 = vld [vmem:[%s2 + $0x134] sm:$0xf]
    %v106 = vld [vmem:[%s2 + $0x138] sm:$0xf]
    %v107 = vld [vmem:[%s2 + $0x13c] sm:$0xf]
    %v108 = vld [vmem:[%s2 + $0x140] sm:$0xf]
    %v109 = vld [vmem:[%s2 + $0x144] sm:$0xf]
    %v110 = vld [vmem:[%s2 + $0x148] sm:$0xf]
    %v111 = vld [vmem:[%s2 + $0x14c] sm:$0xf]
    %v112 = vld [vmem:[%s2 + $0x150] sm:$0xf]
    %v113 = vld [vmem:[%s2 + $0x154] sm:$0xf]
    %v114 = vld [vmem:[%s2 + $0x158] sm:$0xf]
    %v115 = vld [vmem:[%s2 + $0x15c] sm:$0xf]
    %v116 = vld [vmem:[%s2 + $0x160] sm:$0xf]
    %v117 = vld [vmem:[%s2 + $0x164] sm:$0xf]
    %v118 = vld [vmem:[%s2 + $0x168] sm:$0xf]
    %v119 = vld [vmem:[%s2 + $0x16c] sm:$0xf]
    %v120 = vld [vmem:[%s2 + $0x170] sm:$0xf]
    %v121 = vld [vmem:[%s2 + $0x174] sm:$0xf]
    %v122 = vld [vmem:[%s2 + $0x178] sm:$0xf]
    %v123 = vld [vmem:[%s2 + $0x17c] sm:$0xf]
    %v127 = vunpack.c.l.b16 %v25
    %v128 = vunpack.c.h.b16 %v25
    %v129 = vunpack.c.l.b16 %v26
    %v130 = vunpack.c.h.b16 %v26
    %v131 = vunpack.c.l.b16 %v27
    %v132 = vunpack.c.h.b16 %v27
    %v133 = vpack.c.b16 %v127, %v127
    %v134 = vpack.c.b16 %v128, %v128
    %v135 = vpack.c.b16 %v129, %v129
    %v136 = vpack.c.b16 %v130, %v130
    %v137 = vpack.c.b16 %v131, %v131
    %v138 = vpack.c.b16 %v132, %v132
    %v241 = vunpack.c.l.b16 %v28
    %v242 = vunpack.c.l.b16 %v29
    %v243 = vunpack.c.l.b16 %v30
    %v244 = vunpack.c.l.b16 %v31
    %v245 = vunpack.c.l.b16 %v32
    %v246 = vunpack.c.l.b16 %v33
    %v247 = vunpack.c.l.b16 %v34
    %v248 = vunpack.c.l.b16 %v35
    %v249 = vunpack.c.l.b16 %v36
    %v250 = vunpack.c.l.b16 %v37
    %v251 = vunpack.c.l.b16 %v38
    %v252 = vunpack.c.l.b16 %v39
    %v253 = vunpack.c.l.b16 %v40
    %v254 = vunpack.c.l.b16 %v41
    %v255 = vunpack.c.l.b16 %v42
    %v256 = vunpack.c.l.b16 %v43
    %v257 = vunpack.c.l.b16 %v44
    %v258 = vunpack.c.l.b16 %v45
    %v259 = vunpack.c.l.b16 %v46
    %v260 = vunpack.c.l.b16 %v47
    %v261 = vunpack.c.l.b16 %v48
    %v262 = vunpack.c.l.b16 %v49
    %v263 = vunpack.c.l.b16 %v50
    %v264 = vunpack.c.l.b16 %v51
    %v265 = vunpack.c.l.b16 %v52
    %v266 = vunpack.c.l.b16 %v53
    %v267 = vunpack.c.l.b16 %v54
    %v268 = vunpack.c.l.b16 %v55
    %v269 = vunpack.c.l.b16 %v56
    %v270 = vunpack.c.l.b16 %v57
    %v271 = vunpack.c.l.b16 %v58
    %v272 = vunpack.c.l.b16 %v59
    %v273 = vunpack.c.l.b16 %v60
    %v274 = vunpack.c.l.b16 %v61
    %v275 = vunpack.c.l.b16 %v62
    %v276 = vunpack.c.l.b16 %v63
    %v277 = vunpack.c.l.b16 %v64
    %v278 = vunpack.c.l.b16 %v65
    %v279 = vunpack.c.l.b16 %v66
    %v280 = vunpack.c.l.b16 %v67
    %v281 = vunpack.c.l.b16 %v68
    %v282 = vunpack.c.l.b16 %v69
    %v283 = vunpack.c.l.b16 %v70
    %v284 = vunpack.c.l.b16 %v71
    %v285 = vunpack.c.l.b16 %v72
    %v286 = vunpack.c.l.b16 %v73
    %v287 = vunpack.c.l.b16 %v74
    %v288 = vunpack.c.l.b16 %v75
    %v289 = vunpack.c.l.b16 %v76
    %v290 = vunpack.c.l.b16 %v77
    %v291 = vunpack.c.l.b16 %v78
    %v292 = vunpack.c.l.b16 %v79
    %v293 = vunpack.c.l.b16 %v80
    %v294 = vunpack.c.l.b16 %v81
    %v295 = vunpack.c.l.b16 %v82
    %v296 = vunpack.c.l.b16 %v83
    %v297 = vunpack.c.l.b16 %v84
    %v298 = vunpack.c.l.b16 %v85
    %v299 = vunpack.c.l.b16 %v86
    %v300 = vunpack.c.l.b16 %v87
    %v301 = vunpack.c.l.b16 %v88
    %v302 = vunpack.c.l.b16 %v89
    %v303 = vunpack.c.l.b16 %v90
    %v304 = vunpack.c.l.b16 %v91
    %v305 = vunpack.c.l.b16 %v92
    %v306 = vunpack.c.l.b16 %v93
    %v307 = vunpack.c.l.b16 %v94
    %v308 = vunpack.c.l.b16 %v95
    %v309 = vunpack.c.l.b16 %v96
    %v310 = vunpack.c.l.b16 %v97
    %v311 = vunpack.c.l.b16 %v98
    %v312 = vunpack.c.l.b16 %v99
    %v313 = vunpack.c.l.b16 %v100
    %v314 = vunpack.c.l.b16 %v101
    %v315 = vunpack.c.l.b16 %v102
    %v316 = vunpack.c.l.b16 %v103
    %v317 = vunpack.c.l.b16 %v104
    %v318 = vunpack.c.l.b16 %v105
    %v319 = vunpack.c.l.b16 %v106
    %v320 = vunpack.c.l.b16 %v107
    %v321 = vunpack.c.l.b16 %v108
    %v322 = vunpack.c.l.b16 %v109
    %v323 = vunpack.c.l.b16 %v110
    %v324 = vunpack.c.l.b16 %v111
    %v325 = vunpack.c.l.b16 %v112
    %v326 = vunpack.c.l.b16 %v113
    %v327 = vunpack.c.l.b16 %v114
    %v328 = vunpack.c.l.b16 %v115
    %v329 = vunpack.c.l.b16 %v116
    %v330 = vunpack.c.l.b16 %v117
    %v331 = vunpack.c.l.b16 %v118
    %v332 = vunpack.c.l.b16 %v119
    %v333 = vunpack.c.l.b16 %v120
    %v334 = vunpack.c.l.b16 %v121
    %v335 = vunpack.c.l.b16 %v122
    %v336 = vunpack.c.l.b16 %v123
    %v337 = vpack.c.b16 %v242, %v241
    %v338 = vpack.c.b16 %v244, %v243
    %v339 = vpack.c.b16 %v246, %v245
    %v340 = vpack.c.b16 %v248, %v247
    %v341 = vpack.c.b16 %v250, %v249
    %v342 = vpack.c.b16 %v252, %v251
    %v343 = vpack.c.b16 %v254, %v253
    %v344 = vpack.c.b16 %v256, %v255
    %v345 = vpack.c.b16 %v258, %v257
    %v346 = vpack.c.b16 %v260, %v259
    %v347 = vpack.c.b16 %v262, %v261
    %v348 = vpack.c.b16 %v264, %v263
    %v349 = vpack.c.b16 %v266, %v265
    %v350 = vpack.c.b16 %v268, %v267
    %v351 = vpack.c.b16 %v270, %v269
    %v352 = vpack.c.b16 %v272, %v271
    %v353 = vpack.c.b16 %v274, %v273
    %v354 = vpack.c.b16 %v276, %v275
    %v355 = vpack.c.b16 %v278, %v277
    %v356 = vpack.c.b16 %v280, %v279
    %v357 = vpack.c.b16 %v282, %v281
    %v358 = vpack.c.b16 %v284, %v283
    %v359 = vpack.c.b16 %v286, %v285
    %v360 = vpack.c.b16 %v288, %v287
    %v361 = vpack.c.b16 %v290, %v289
    %v362 = vpack.c.b16 %v292, %v291
    %v363 = vpack.c.b16 %v294, %v293
    %v364 = vpack.c.b16 %v296, %v295
    %v365 = vpack.c.b16 %v298, %v297
    %v366 = vpack.c.b16 %v300, %v299
    %v367 = vpack.c.b16 %v302, %v301
    %v368 = vpack.c.b16 %v304, %v303
    %v369 = vpack.c.b16 %v306, %v305
    %v370 = vpack.c.b16 %v308, %v307
    %v371 = vpack.c.b16 %v310, %v309
    %v372 = vpack.c.b16 %v312, %v311
    %v373 = vpack.c.b16 %v314, %v313
    %v374 = vpack.c.b16 %v316, %v315
    %v375 = vpack.c.b16 %v318, %v317
    %v376 = vpack.c.b16 %v320, %v319
    %v377 = vpack.c.b16 %v322, %v321
    %v378 = vpack.c.b16 %v324, %v323
    %v379 = vpack.c.b16 %v326, %v325
    %v380 = vpack.c.b16 %v328, %v327
    %v381 = vpack.c.b16 %v330, %v329
    %v382 = vpack.c.b16 %v332, %v331
    %v383 = vpack.c.b16 %v334, %v333
    %v384 = vpack.c.b16 %v336, %v335
    %433 = vmatprep.subr.bf16.mxu0 0
    %434 = vmatpush1.bf16.msra.mxu0 %v344
    %435 = vmatprep.subr.bf16.mxu0 0
    %436 = vmatpush1.bf16.msra.mxu0 %v343
    %437 = vmatprep.subr.bf16.mxu0 0
    %438 = vmatpush1.bf16.msra.mxu0 %v342
    %439 = vmatprep.subr.bf16.mxu0 0
    %440 = vmatpush1.bf16.msra.mxu0 %v341
    %441 = vmatprep.subr.bf16.mxu0 0
    %442 = vmatpush1.bf16.msra.mxu0 %v340
    %443 = vmatprep.subr.bf16.mxu0 0
    %444 = vmatpush1.bf16.msra.mxu0 %v339
    %445 = vmatprep.subr.bf16.mxu0 0
    %446 = vmatpush1.bf16.msra.mxu0 %v338
    %447 = vmatprep.subr.bf16.mxu0 0
    %448 = vmatpush1.bf16.msra.mxu0 %v337
    %449 = vmatprep.subr.bf16.mxu0 0
    %450 = vmatpush2.bf16.msra.mxu0 %v352
    %451 = vmatprep.subr.bf16.mxu0 0
    %452 = vmatpush2.bf16.msra.mxu0 %v351
    %453 = vmatprep.subr.bf16.mxu0 0
    %454 = vmatpush2.bf16.msra.mxu0 %v350
    %455 = vmatprep.subr.bf16.mxu0 0
    %456 = vmatpush2.bf16.msra.mxu0 %v349
    %457 = vmatprep.subr.bf16.mxu0 0
    %458 = vmatpush2.bf16.msra.mxu0 %v348
    %459 = vmatprep.subr.bf16.mxu0 0
    %460 = vmatpush2.bf16.msra.mxu0 %v347
    %461 = vmatprep.subr.bf16.mxu0 0
    %462 = vmatpush2.bf16.msra.mxu0 %v346
    %463 = vmatprep.subr.bf16.mxu0 0
    %464 = vmatpush2.bf16.msra.mxu0 %v345
    %465 = vmatprep.mubr.bf16.mxu0 %v134
    %466 = vmatmul.mubr.bf16.gmra.mxu0 %v133
    %v467 = vpop.f32.mrf.mxu0
    %v468 = vadd.f32 0.0, %v467
    %v469 = vpop.f32.mrf.mxu0
    %v470 = vpop.f32.mrf.mxu0
    %v471 = vpop.f32.mrf.mxu0
    %472 = vdwg.mxu0
    %473 = vmatprep.subr.bf16.mxu0 0
    %474 = vmatpush1.bf16.msra.mxu0 %v360
    %475 = vmatprep.subr.bf16.mxu0 0
    %476 = vmatpush1.bf16.msra.mxu0 %v359
    %477 = vmatprep.subr.bf16.mxu0 0
    %478 = vmatpush1.bf16.msra.mxu0 %v358
    %479 = vmatprep.subr.bf16.mxu0 0
    %480 = vmatpush1.bf16.msra.mxu0 %v357
    %481 = vmatprep.subr.bf16.mxu0 0
    %482 = vmatpush1.bf16.msra.mxu0 %v356
    %483 = vmatprep.subr.bf16.mxu0 0
    %484 = vmatpush1.bf16.msra.mxu0 %v355
    %485 = vmatprep.subr.bf16.mxu0 0
    %486 = vmatpush1.bf16.msra.mxu0 %v354
    %487 = vmatprep.subr.bf16.mxu0 0
    %488 = vmatpush1.bf16.msra.mxu0 %v353
    %489 = vmatprep.subr.bf16.mxu0 0
    %490 = vmatpush2.bf16.msra.mxu0 %v368
    %491 = vmatprep.subr.bf16.mxu0 0
    %492 = vmatpush2.bf16.msra.mxu0 %v367
    %493 = vmatprep.subr.bf16.mxu0 0
    %494 = vmatpush2.bf16.msra.mxu0 %v366
    %495 = vmatprep.subr.bf16.mxu0 0
    %496 = vmatpush2.bf16.msra.mxu0 %v365
    %497 = vmatprep.subr.bf16.mxu0 0
    %498 = vmatpush2.bf16.msra.mxu0 %v364
    %499 = vmatprep.subr.bf16.mxu0 0
    %500 = vmatpush2.bf16.msra.mxu0 %v363
    %501 = vmatprep.subr.bf16.mxu0 0
    %502 = vmatpush2.bf16.msra.mxu0 %v362
    %503 = vmatprep.subr.bf16.mxu0 0
    %504 = vmatpush2.bf16.msra.mxu0 %v361
    %505 = vmatprep.mubr.bf16.mxu0 %v136
    %506 = vmatmul.mubr.bf16.gmra.mxu0 %v135
    %v507 = vpop.f32.mrf.mxu0
    %v508 = vadd.f32 %v468, %v507
    %v509 = vpop.f32.mrf.mxu0
    %v510 = vpop.f32.mrf.mxu0
    %v511 = vpop.f32.mrf.mxu0
    %512 = vdwg.mxu0
    %513 = vmatprep.subr.bf16.mxu0 0
    %514 = vmatpush1.bf16.msra.mxu0 %v376
    %515 = vmatprep.subr.bf16.mxu0 0
    %516 = vmatpush1.bf16.msra.mxu0 %v375
    %517 = vmatprep.subr.bf16.mxu0 0
    %518 = vmatpush1.bf16.msra.mxu0 %v374
    %519 = vmatprep.subr.bf16.mxu0 0
    %520 = vmatpush1.bf16.msra.mxu0 %v373
    %521 = vmatprep.subr.bf16.mxu0 0
    %522 = vmatpush1.bf16.msra.mxu0 %v372
    %523 = vmatprep.subr.bf16.mxu0 0
    %524 = vmatpush1.bf16.msra.mxu0 %v371
    %525 = vmatprep.subr.bf16.mxu0 0
    %526 = vmatpush1.bf16.msra.mxu0 %v370
    %527 = vmatprep.subr.bf16.mxu0 0
    %528 = vmatpush1.bf16.msra.mxu0 %v369
    %529 = vmatprep.subr.bf16.mxu0 0
    %530 = vmatpush2.bf16.msra.mxu0 %v384
    %531 = vmatprep.subr.bf16.mxu0 0
    %532 = vmatpush2.bf16.msra.mxu0 %v383
    %533 = vmatprep.subr.bf16.mxu0 0
    %534 = vmatpush2.bf16.msra.mxu0 %v382
    %535 = vmatprep.subr.bf16.mxu0 0
    %536 = vmatpush2.bf16.msra.mxu0 %v381
    %537 = vmatprep.subr.bf16.mxu0 0
    %538 = vmatpush2.bf16.msra.mxu0 %v380
    %539 = vmatprep.subr.bf16.mxu0 0
    %540 = vmatpush2.bf16.msra.mxu0 %v379
    %541 = vmatprep.subr.bf16.mxu0 0
    %542 = vmatpush2.bf16.msra.mxu0 %v378
    %543 = vmatprep.subr.bf16.mxu0 0
    %544 = vmatpush2.bf16.msra.mxu0 %v377
    %545 = vmatprep.mubr.bf16.mxu0 %v138
    %546 = vmatmul.mubr.bf16.gmra.mxu0 %v137
    %v547 = vpop.f32.mrf.mxu0
    %v548 = vadd.f32 %v508, %v547
    %v549 = vpop.f32.mrf.mxu0
    %v550 = vpop.f32.mrf.mxu0
    %v551 = vpop.f32.mrf.mxu0
    %552 = vdwg.mxu0
    %v553 = vadd.f32 %v24, %v548
    %vm554 = vcmask 261120
    %555 = vst.msk [vmem:[#allocation2] sm:$0xff] %vm554, %v553
    // Predicated region
    $region18: #{tpu_custom_call.1} parent=1 // pred_check
      %p556 = pneg %p18
    $region19: #{tpu_custom_call.1} parent=1 // pred_check_branch
      %558 = sbr.rel (%p556) target = $region21
    $region20: #{tpu_custom_call.1} parent=1 // pred_region
      %v559 = vld [vmem:[#allocation2] sm:$0xff]
      %v560 = vmul.f32 %v559, %v559
      %v561 = vsel %vm554, %v560, 0.0
      %562 = vadd.xlane.f32.xlu0 %v561
      %v563 = vpop.xlane.xlu0 %562
      %s564 = sld [smem:[#allocation4]]
      %v565 = vstv %s564
      %v566 = vmul.f32 %v565, 1.442695
      %v567 = vpow.pop %v566
      %s568 = vtos %v567
      %v569 = vmax.f32 %v563, 1e-30
      %v570 = vrsqrt.pop %v569
      %v571 = vstv %s568
      %v572 = vmul.f32 %v571, %v570
      %v573 = vmul.f32 %v559, %v572
      %v574 = vpack.c.bf16 %v573, %v573
      %v575 = vld [vmem:[%s3] sm:$0xf]
      %v576 = vld [vmem:[%s3 + $0x4] sm:$0xf]
      %v577 = vld [vmem:[%s3 + $0x8] sm:$0xf]
      %v578 = vld [vmem:[%s3 + $0xc] sm:$0xf]
      %v579 = vld [vmem:[%s3 + $0x10] sm:$0xf]
      %v580 = vld [vmem:[%s3 + $0x14] sm:$0xf]
      %v581 = vld [vmem:[%s3 + $0x18] sm:$0xf]
      %v582 = vld [vmem:[%s3 + $0x1c] sm:$0xf]
      %v583 = vld [vmem:[%s3 + $0x20] sm:$0xf]
      %v584 = vld [vmem:[%s3 + $0x24] sm:$0xf]
      %v585 = vld [vmem:[%s3 + $0x28] sm:$0xf]
      %v586 = vld [vmem:[%s3 + $0x2c] sm:$0xf]
      %v587 = vld [vmem:[%s3 + $0x30] sm:$0xf]
      %v588 = vld [vmem:[%s3 + $0x34] sm:$0xf]
      %v589 = vld [vmem:[%s3 + $0x38] sm:$0xf]
      %v590 = vld [vmem:[%s3 + $0x3c] sm:$0xf]
      %v607 = vunpack.c.l.b16 %v575
      %v608 = vunpack.c.l.b16 %v576
      %v609 = vunpack.c.l.b16 %v577
      %v610 = vunpack.c.l.b16 %v578
      %v611 = vunpack.c.l.b16 %v579
      %v612 = vunpack.c.l.b16 %v580
      %v613 = vunpack.c.l.b16 %v581
      %v614 = vunpack.c.l.b16 %v582
      %v615 = vunpack.c.l.b16 %v583
      %v616 = vunpack.c.l.b16 %v584
      %v617 = vunpack.c.l.b16 %v585
      %v618 = vunpack.c.l.b16 %v586
      %v619 = vunpack.c.l.b16 %v587
      %v620 = vunpack.c.l.b16 %v588
      %v621 = vunpack.c.l.b16 %v589
      %v622 = vunpack.c.l.b16 %v590
      %v623 = vpack.c.b16 %v608, %v607
      %v624 = vpack.c.b16 %v610, %v609
      %v625 = vpack.c.b16 %v612, %v611
      %v626 = vpack.c.b16 %v614, %v613
      %v627 = vpack.c.b16 %v616, %v615
      %v628 = vpack.c.b16 %v618, %v617
      %v629 = vpack.c.b16 %v620, %v619
      %v630 = vpack.c.b16 %v622, %v621
      %v632 = vsel %vm554, %v574, 0
      %v635 = vsel %vm554, %v623, 0
      %v638 = vsel %vm554, %v624, 0
      %v641 = vsel %vm554, %v625, 0
      %v644 = vsel %vm554, %v626, 0
      %v647 = vsel %vm554, %v627, 0
      %v650 = vsel %vm554, %v628, 0
      %v653 = vsel %vm554, %v629, 0
      %v656 = vsel %vm554, %v630, 0
      %658 = vmatprep.subr.bf16.mxu0 0
      %659 = vmatpush1.bf16.xpose.msra.mxu0 %v656
      %660 = vmatprep.subr.bf16.mxu0 0
      %661 = vmatpush1.bf16.xpose.msra.mxu0 %v653
      %662 = vmatprep.subr.bf16.mxu0 0
      %663 = vmatpush1.bf16.xpose.msra.mxu0 %v650
      %664 = vmatprep.subr.bf16.mxu0 0
      %665 = vmatpush1.bf16.xpose.msra.mxu0 %v647
      %666 = vmatprep.subr.bf16.mxu0 0
      %667 = vmatpush1.bf16.xpose.msra.mxu0 %v644
      %668 = vmatprep.subr.bf16.mxu0 0
      %669 = vmatpush1.bf16.xpose.msra.mxu0 %v641
      %670 = vmatprep.subr.bf16.mxu0 0
      %671 = vmatpush1.bf16.xpose.msra.mxu0 %v638
      %672 = vmatprep.subr.bf16.mxu0 0
      %673 = vmatpush1.bf16.xpose.msra.mxu0 %v635
      %674 = vmatprep.subr.bf16.mxu0 0
      %675 = vmatpush2.bf16.xpose.msra.mxu0 0
      %676 = vmatprep.subr.bf16.mxu0 0
      %677 = vmatpush2.bf16.xpose.msra.mxu0 0
      %678 = vmatprep.subr.bf16.mxu0 0
      %679 = vmatpush2.bf16.xpose.msra.mxu0 0
      %680 = vmatprep.subr.bf16.mxu0 0
      %681 = vmatpush2.bf16.xpose.msra.mxu0 0
      %682 = vmatprep.subr.bf16.mxu0 0
      %683 = vmatpush2.bf16.xpose.msra.mxu0 0
      %684 = vmatprep.subr.bf16.mxu0 0
      %685 = vmatpush2.bf16.xpose.msra.mxu0 0
      %686 = vmatprep.subr.bf16.mxu0 0
      %687 = vmatpush2.bf16.xpose.msra.mxu0 0
      %688 = vmatprep.subr.bf16.mxu0 0
      %689 = vmatpush2.bf16.xpose.msra.mxu0 0
      %690 = vmatprep.mubr.bf16.mxu0 0
      %691 = vmatmul.mubr.bf16.gmra.mxu0 %v632
      %v692 = vpop.f32.mrf.mxu0
      %v693 = vadd.f32 0.0, %v692
      %v694 = vpop.f32.mrf.mxu0
      %v695 = vpop.f32.mrf.mxu0
      %v696 = vpop.f32.mrf.mxu0
      %697 = vdwg.mxu0
      %698 = vst [vmem:[#allocation5] sm:$0xff] %v693
    $region21: #{tpu_custom_call.1} parent=1 // pred_fallthru
      _
    // Predicated region
    $region22: #{tpu_custom_call.1} parent=1 // pred_check
      _
    $region23: #{tpu_custom_call.1} parent=1 // pred_check_branch
      %700 = sbr.rel (0) target = $region25
    $region24: #{tpu_custom_call.1} parent=1 // pred_region
      %s702 = ssub.s32 128, 128
      %703 = vsyncadd [#allocation6], %s702
      %s705 = sshll.u32 [#allocation5], 4
      %s706 = int_to_ptr.vmem [resolvable:$true] %s705
      %708 = dma.vmem_to_hbm [thread:$0]  %s706, 128, %s4, [#allocation6]
    $region25: #{tpu_custom_call.1} parent=1 // pred_fallthru
      _
    // Predicated region
    $region26: #{tpu_custom_call.1} parent=1 // pred_check
      _
    $region27: #{tpu_custom_call.1} parent=1 // pred_check_branch
      %710 = sbr.rel (0) target = $region29
    $region28: #{tpu_custom_call.1} parent=1 // pred_region
      %711 = dma.done [#allocation6], 128
    $region29: #{tpu_custom_call.1} parent=1 // pred_fallthru
      _
    %712 = vsyncpa [#allocation6], 1

</llo_original>
